<compile_context>
chip_gen: v7x
topology: tpu7x:2x2x1
jax: 0.10.0
libtpu: 0.0.40
codegen_flags: <defaults>
</compile_context>

<pallas_src>
import functools

import jax
import jax.numpy as jnp
from jax.experimental import pallas as pl
from jax.experimental.pallas import tpu as pltpu


_SUBLANE_ROWS = {4: 8, 2: 16, 1: 32}   # sublane granularity by element size
_LANE_TILE_CAP = 2048                  # reduction tile on lanes (multiple of 128)


def _round_up(x, m):
    return -(-x // m) * m


def _soft_iou_loss_kernel(pred_ref, tgt_ref, out_ref, num_acc, spt_acc, *,
                          eps, n_total, block_n):
    k = pl.program_id(1)

    @pl.when(k == 0)
    def _init():
        num_acc[...] = jnp.zeros_like(num_acc)
        spt_acc[...] = jnp.zeros_like(spt_acc)

    # Upcast to f32 for all arithmetic (v5e has no bf16 VPU/EUP path); callers
    # may feed bf16 logits / bf16 or int8 masks to halve HBM traffic.
    p = jax.nn.sigmoid(pred_ref[...].astype(jnp.float32))     # (tb, tn), EUP
    t = tgt_ref[...].astype(jnp.float32)                      # (tb, tn)

    # Mask the tail N-block so padded (out-of-bounds) lanes never reach the sums.
    if n_total % block_n != 0:
        col = jax.lax.broadcasted_iota(jnp.int32, (1, block_n), 1)
        valid = (k * block_n + col) < n_total                 # (1, tn) bool
        p = jnp.where(valid, p, 0.0)
        t = jnp.where(valid, t, 0.0)

    # den = sum(p) + sum(t) - sum(p*t): accumulate sum(p*t) and sum(p+t) only
    # (4 VPU ops/elem instead of 5) and form den in the finalize.
    num_acc[...] += jnp.sum(p * t, axis=-1, keepdims=True)
    spt_acc[...] += jnp.sum(p + t, axis=-1, keepdims=True)

    @pl.when(k == pl.num_programs(1) - 1)
    def _finalize():
        num = num_acc[...] + eps
        den = spt_acc[...] - num_acc[...] + eps
        # Exact divide: O(tb) per batch tile, nowhere near the critical path,
        # so the approx reciprocal bought nothing and cost accuracy.
        out_ref[...] = 1.0 - num / den


def _vmem_budget_bytes():
    """Generation-aware (per-step footprint budget, vmem_limit_bytes)."""
    try:
        cap = int(pltpu.get_tpu_info().vmem_capacity_bytes)
        if cap <= 0:
            raise ValueError
    except Exception:
        cap = 64 * 1024 * 1024          # conservative: assume v7x (64 MiB / TC)
    vmem_limit = min(cap * 3 // 4, 96 * 1024 * 1024)   # 48 MiB v7x, 96 MiB v5e/v6e
    footprint_budget = vmem_limit // 2                 # leave pipeline headroom
    return footprint_budget, vmem_limit


def _pick_tiles(B, N, pred_dtype, tgt_dtype, budget):
    """Pick (tb, tn).  Budget covers 2x double-buffered inputs *plus* the f32
    upcast temporaries (~3 x tb*tn*4 B).  With tn capped at _LANE_TILE_CAP the
    min_rows fallback can never exceed the budget."""
    isz_p = jnp.dtype(pred_dtype).itemsize
    isz_t = jnp.dtype(tgt_dtype).itemsize
    min_rows = _SUBLANE_ROWS.get(min(isz_p, isz_t), 8)

    # Lane-dense reduction tile: full N when small, else a multiple of 128.
    tn = N if N <= _LANE_TILE_CAP else _LANE_TILE_CAP

    # Bytes per row per grid step: double-buffered inputs + ~3 f32 temporaries.
    bytes_per_row = tn * (2 * (isz_p + isz_t) + 3 * 4)
    tb = max(min_rows, (budget // bytes_per_row) // min_rows * min_rows)

    # Megacore (v7x): keep at least 2 batch tiles whenever the batch allows it.
    if B > min_rows:
        tb = min(tb, _round_up(-(-B // 2), min_rows))
    # Never tile past the (sublane-rounded) batch.
    tb = min(tb, _round_up(B, min_rows))
    return max(tb, min_rows), tn


def soft_iou_loss(inputs, targets, reduction="none", e=1e-8,
                  batch_tile=None, n_tile=None):
    """Pallas equivalent of softIoULoss.forward.

    Returns (B, 1) f32 for reduction='none' (matching keepdim=True), scalar for
    'mean'.  The kernel upcasts internally, so callers may pass bf16 logits and
    bf16 (or int8) {0,1} masks to reduce HBM traffic on this bandwidth-bound op.
    """
    assert reduction in ("none", "mean")
    assert inputs.shape == targets.shape and inputs.ndim == 2
    B, N = inputs.shape

    budget, vmem_limit = _vmem_budget_bytes()
    tb_auto, tn_auto = _pick_tiles(B, N, inputs.dtype, targets.dtype, budget)
    tb = batch_tile if batch_tile is not None else tb_auto
    tn = n_tile if n_tile is not None else tn_auto

    kernel = functools.partial(_soft_iou_loss_kernel, eps=e, n_total=N, block_n=tn)

    out = pl.pallas_call(
        kernel,
        out_shape=jax.ShapeDtypeStruct((B, 1), jnp.float32),
        grid_spec=pltpu.PrefetchScalarGridSpec(
            num_scalar_prefetch=0,
            grid=(pl.cdiv(B, tb), pl.cdiv(N, tn)),
            in_specs=[
                pl.BlockSpec((tb, tn), lambda i, k: (i, k)),
                pl.BlockSpec((tb, tn), lambda i, k: (i, k)),
            ],
            out_specs=pl.BlockSpec((tb, 1), lambda i, k: (i, 0)),
            scratch_shapes=[
                pltpu.VMEM((tb, 1), jnp.float32),   # sum(p * t)
                pltpu.VMEM((tb, 1), jnp.float32),   # sum(p + t)
            ],
        ),
        compiler_params=pltpu.CompilerParams(
            # Batch tiles are independent -> shard across TCs; N is a reduction.
            dimension_semantics=("parallel", "arbitrary"),
            vmem_limit_bytes=int(vmem_limit),
        ),
    )(inputs, targets)

    loss = out                                       # (B, 1) == PyTorch 'none'
    if reduction == "mean":
        loss = jnp.mean(loss)
    return loss


def _reference(inputs, targets, e=1e-8):
    # Pure-JAX reference matching the PyTorch forward exactly (f32).
    p = jax.nn.sigmoid(inputs.astype(jnp.float32))
    t = targets.astype(jnp.float32)
    num = jnp.sum(p * t, axis=1, keepdims=True) + e
    den = jnp.sum(p + t - p * t, axis=1, keepdims=True) + e
    return 1.0 - num / den


if __name__ == "__main__":
    key = jax.random.PRNGKey(0)
    k1, k2, k3, k4, k5, k6 = jax.random.split(key, 6)

    # --- small, single-tile case ---------------------------------------------
    B, N = 8, 128
    logits = jax.random.normal(k1, (B, N), dtype=jnp.float32)
    masks = (jax.random.uniform(k2, (B, N)) < 0.3).astype(jnp.float32)
    masks = masks.at[-1].set(0.0)                    # empty-mask row (den ~ eps)

    loss = soft_iou_loss(logits, masks, reduction="none")
    jax.block_until_ready(loss)
    ref = _reference(logits, masks)
    assert loss.shape == (B, 1)
    assert jnp.allclose(loss, ref, atol=1e-5, rtol=1e-5), (loss, ref)

    # --- multi-tile grid, non-divisible B and N (exercises tail masking) -----
    B2, N2 = 40, 320
    logits2 = jax.random.normal(k3, (B2, N2), dtype=jnp.float32)
    masks2 = (jax.random.uniform(k4, (B2, N2)) < 0.5).astype(jnp.float32)

    loss2 = soft_iou_loss(logits2, masks2, reduction="none",
                          batch_tile=16, n_tile=128)     # grid (3, 3)
    jax.block_until_ready(loss2)
    ref2 = _reference(logits2, masks2)
    assert loss2.shape == (B2, 1)
    assert jnp.allclose(loss2, ref2, atol=1e-5, rtol=1e-5), (loss2, ref2)

    # --- narrow-dtype path (bf16 halves HBM traffic; 0/1 masks exact in bf16) -
    B3, N3 = 64, 256
    logits3 = jax.random.normal(k5, (B3, N3), dtype=jnp.float32)
    masks3 = (jax.random.uniform(k6, (B3, N3)) < 0.4).astype(jnp.float32)

    loss3 = soft_iou_loss(logits3.astype(jnp.bfloat16), masks3.astype(jnp.bfloat16))
    jax.block_until_ready(loss3)
    ref3 = _reference(logits3, masks3)
    assert loss3.shape == (B3, 1)
    assert jnp.allclose(loss3, ref3, atol=2e-2, rtol=2e-2), (loss3, ref3)

    # --- 'mean' reduction path -------------------------------------------------
    lmean = soft_iou_loss(logits, masks, reduction="mean")
    jax.block_until_ready(lmean)
    assert jnp.allclose(lmean, jnp.mean(ref), atol=1e-5, rtol=1e-5)

    print("KERNEL_OK")
</pallas_src>

<mosaic_0001>
module attributes {stable_mosaic.version = 11 : i64} {
  func.func @_soft_iou_loss_kernel(%arg0: i32, %arg1: i32, %arg2: memref<8x128xf32, #tpu.memory_space<vmem>>, %arg3: memref<8x128xf32, #tpu.memory_space<vmem>>, %arg4: memref<8x1xf32, #tpu.memory_space<vmem>>, %arg5: memref<8x1xf32, #tpu.memory_space<vmem>>, %arg6: memref<8x1xf32, #tpu.memory_space<vmem>>) attributes {dimension_semantics = [#tpu.dimension_semantics<parallel>, #tpu.dimension_semantics<arbitrary>], iteration_bounds = array<i64: 1, 1>, scalar_prefetch = 0 : i64, scratch_operands = 2 : i64, tpu.core_type = #tpu.core_type<tc>, window_params = [{transform_indices = @transform_0, window_bounds = array<i64: 8, 128>}, {transform_indices = @transform_1, window_bounds = array<i64: 8, 128>}, {transform_indices = @transform_2, window_bounds = array<i64: 8, 1>}]} {
    %c0_i32 = arith.constant 0 : i32
    %0 = arith.cmpi eq, %arg1, %c0_i32 : i32
    %1 = arith.extui %0 : i1 to i32
    %c0_i32_0 = arith.constant 0 : i32
    %2 = arith.cmpi ne, %1, %c0_i32_0 : i32
    scf.if %2 {
      %cst_16 = arith.constant 0.000000e+00 : f32
      %25 = vector.broadcast %cst_16 : f32 to vector<8x1xf32>
      %c0_17 = arith.constant 0 : index
      %c0_18 = arith.constant 0 : index
      %26 = vector.load %arg5[%c0_17, %c0_18] : memref<8x1xf32, #tpu.memory_space<vmem>>, vector<8x1xf32>
      tpu.vector_store %arg5[%c0_17, %c0_18], %25 {strides = array<i32>} : memref<8x1xf32, #tpu.memory_space<vmem>>, vector<8x1xf32>,
      %cst_19 = arith.constant 0.000000e+00 : f32
      %27 = vector.broadcast %cst_19 : f32 to vector<8x1xf32>
      %c0_20 = arith.constant 0 : index
      %c0_21 = arith.constant 0 : index
      %28 = vector.load %arg6[%c0_20, %c0_21] : memref<8x1xf32, #tpu.memory_space<vmem>>, vector<8x1xf32>
      tpu.vector_store %arg6[%c0_20, %c0_21], %27 {strides = array<i32>} : memref<8x1xf32, #tpu.memory_space<vmem>>, vector<8x1xf32>,
    } else {
    }
    %c0 = arith.constant 0 : index
    %c0_1 = arith.constant 0 : index
    %3 = vector.load %arg2[%c0, %c0_1] : memref<8x128xf32, #tpu.memory_space<vmem>>, vector<8x128xf32>
    %4 = arith.negf %3 : vector<8x128xf32>
    %5 = math.exp %4 : vector<8x128xf32>
    %cst = arith.constant 1.000000e+00 : f32
    %6 = vector.broadcast %cst : f32 to vector<8x128xf32>
    %7 = arith.addf %6, %5 : vector<8x128xf32>
    %8 = arith.divf %6, %7 : vector<8x128xf32>
    %c0_2 = arith.constant 0 : index
    %c0_3 = arith.constant 0 : index
    %9 = vector.load %arg3[%c0_2, %c0_3] : memref<8x128xf32, #tpu.memory_space<vmem>>, vector<8x128xf32>
    %c0_4 = arith.constant 0 : index
    %c0_5 = arith.constant 0 : index
    %10 = vector.load %arg5[%c0_4, %c0_5] : memref<8x1xf32, #tpu.memory_space<vmem>>, vector<8x1xf32>
    %11 = arith.mulf %8, %9 : vector<8x128xf32>
    %cst_6 = arith.constant dense<0.000000e+00> : vector<8xf32>
    %12 = vector.multi_reduction <add>, %11, %cst_6 [1] : vector<8x128xf32> to vector<8xf32>
    %13 = vector.shape_cast %12 : vector<8xf32> to vector<8x1xf32>
    %14 = arith.addf %10, %13 : vector<8x1xf32>
    %c0_7 = arith.constant 0 : index
    %c0_8 = arith.constant 0 : index
    %15 = vector.load %arg5[%c0_7, %c0_8] : memref<8x1xf32, #tpu.memory_space<vmem>>, vector<8x1xf32>
    tpu.vector_store %arg5[%c0_7, %c0_8], %14 {strides = array<i32>} : memref<8x1xf32, #tpu.memory_space<vmem>>, vector<8x1xf32>,
    %c0_9 = arith.constant 0 : index
    %c0_10 = arith.constant 0 : index
    %16 = vector.load %arg6[%c0_9, %c0_10] : memref<8x1xf32, #tpu.memory_space<vmem>>, vector<8x1xf32>
    %17 = arith.addf %8, %9 : vector<8x128xf32>
    %cst_11 = arith.constant dense<0.000000e+00> : vector<8xf32>
    %18 = vector.multi_reduction <add>, %17, %cst_11 [1] : vector<8x128xf32> to vector<8xf32>
    %19 = vector.shape_cast %18 : vector<8xf32> to vector<8x1xf32>
    %20 = arith.addf %16, %19 : vector<8x1xf32>
    %c0_12 = arith.constant 0 : index
    %c0_13 = arith.constant 0 : index
    %21 = vector.load %arg6[%c0_12, %c0_13] : memref<8x1xf32, #tpu.memory_space<vmem>>, vector<8x1xf32>
    tpu.vector_store %arg6[%c0_12, %c0_13], %20 {strides = array<i32>} : memref<8x1xf32, #tpu.memory_space<vmem>>, vector<8x1xf32>,
    %c0_i32_14 = arith.constant 0 : i32
    %22 = arith.cmpi eq, %arg1, %c0_i32_14 : i32
    %23 = arith.extui %22 : i1 to i32
    %c0_i32_15 = arith.constant 0 : i32
    %24 = arith.cmpi ne, %23, %c0_i32_15 : i32
    scf.if %24 {
      %c0_16 = arith.constant 0 : index
      %c0_17 = arith.constant 0 : index
      %25 = vector.load %arg5[%c0_16, %c0_17] : memref<8x1xf32, #tpu.memory_space<vmem>>, vector<8x1xf32>
      %cst_18 = arith.constant 9.99999993E-9 : f32
      %26 = vector.broadcast %cst_18 : f32 to vector<8x1xf32>
      %27 = arith.addf %25, %26 : vector<8x1xf32>
      %c0_19 = arith.constant 0 : index
      %c0_20 = arith.constant 0 : index
      %28 = vector.load %arg6[%c0_19, %c0_20] : memref<8x1xf32, #tpu.memory_space<vmem>>, vector<8x1xf32>
      %c0_21 = arith.constant 0 : index
      %c0_22 = arith.constant 0 : index
      %29 = vector.load %arg5[%c0_21, %c0_22] : memref<8x1xf32, #tpu.memory_space<vmem>>, vector<8x1xf32>
      %30 = arith.subf %28, %29 : vector<8x1xf32>
      %cst_23 = arith.constant 9.99999993E-9 : f32
      %31 = vector.broadcast %cst_23 : f32 to vector<8x1xf32>
      %32 = arith.addf %30, %31 : vector<8x1xf32>
      %33 = arith.divf %27, %32 : vector<8x1xf32>
      %cst_24 = arith.constant 1.000000e+00 : f32
      %34 = vector.broadcast %cst_24 : f32 to vector<8x1xf32>
      %35 = arith.subf %34, %33 : vector<8x1xf32>
      %c0_25 = arith.constant 0 : index
      %c0_26 = arith.constant 0 : index
      %36 = vector.load %arg4[%c0_25, %c0_26] : memref<8x1xf32, #tpu.memory_space<vmem>>, vector<8x1xf32>
      tpu.vector_store %arg4[%c0_25, %c0_26], %35 {strides = array<i32>} : memref<8x1xf32, #tpu.memory_space<vmem>>, vector<8x1xf32>,
    } else {
    }
    return
  }
  func.func @transform_0(%arg0: i32, %arg1: i32) -> (i32, i32) {
    %c0_i32 = arith.constant 0 : i32
    return %arg0, %arg1 : i32, i32
  }
  func.func @transform_1(%arg0: i32, %arg1: i32) -> (i32, i32) {
    %c0_i32 = arith.constant 0 : i32
    return %arg0, %arg1 : i32, i32
  }
  func.func @transform_2(%arg0: i32, %arg1: i32) -> (i32, i32) {
    %c0_i32 = arith.constant 0 : i32
    %c0_i32_0 = arith.constant 0 : i32
    return %arg0, %c0_i32 : i32, i32
  }
}

</mosaic_0001>

<llo_original>
// kernel: tpu_custom_call.1
$region0: #{tpu_custom_call.1}
  #allocation0 [shape = 'u32[]', space=smem, size = 0x4, offset = 0x4, fixed_abs, tag = 'smem constant byte address 0x4 - core index']
  #allocation1 [shape = 'u32[144,128]{1,0:T(1,128)}', space=vmem, size = 0x12000, scoped, tag = 'internal scratch']
  #allocation2 [shape = 'f32[8,1]{1,0:T(8,128)}', space=vmem, size = 0x1000, scoped, tag = 'scratch operand']
  #allocation3 [shape = 'f32[8,1]{1,0:T(8,128)}', space=vmem, size = 0x1000, scoped, tag = 'scratch operand']
  %s0 = inlined_call_operand.hbm [shape: f32[8,128], index: 0, kind: input, shape index: {}]
  %s1 = inlined_call_operand.hbm [shape: f32[8,128], index: 1, kind: input, shape index: {}]
  %s2 = inlined_call_operand.vmem [shape: f32[8,1], index: 2, kind: output, shape index: {}]
  %s3 = sld [smem:[#allocation0]]
  $region34: #{tpu_custom_call.1} parent=0
    _
  %s5 = ssub.s32 1, %s3
  %s6 = scalar_select 0, %s5, %s3
  $region1: #{tpu_custom_call.1} parent=0
    #allocation4 [shape = 'u8[4096]{0}', space=vmem, size = 0x1000, scoped, tag = 'input window, operand 0, single buffered']
    #allocation5 [shape = 's32[1]{0}', space=sflag, size = 0x4, scoped, tag = 'scoped memory for tpu_custom_call.1']
    #allocation6 [shape = 'u8[4096]{0}', space=vmem, size = 0x1000, scoped, tag = 'input window, operand 1, single buffered']
    #allocation7 [shape = 's32[1]{0}', space=sflag, size = 0x4, scoped, tag = 'scoped memory for tpu_custom_call.1']
    %7 = vsyncpa [#allocation5], 0
    %8 = vsyncpa [#allocation7], 0
    // Predicated region
    $region2: #{tpu_custom_call.1} parent=1 // pred_check
      _
    $region3: #{tpu_custom_call.1} parent=1 // pred_check_branch
      %10 = sbr.rel (0) target = $region5
    $region4: #{tpu_custom_call.1} parent=1 // pred_region
      %s12 = ssub.s32 128, 128
      %13 = vsyncadd [#allocation5], %s12
      %s15 = sshll.u32 [#allocation4], 4
      %s16 = int_to_ptr.vmem [resolvable:$true] %s15
      %18 = dma.hbm_to_vmem [thread:$0]  %s0, 128, %s16, [#allocation5]
    $region5: #{tpu_custom_call.1} parent=1 // pred_fallthru
      _
    // Predicated region
    $region6: #{tpu_custom_call.1} parent=1 // pred_check
      _
    $region7: #{tpu_custom_call.1} parent=1 // pred_check_branch
      %20 = sbr.rel (0) target = $region9
    $region8: #{tpu_custom_call.1} parent=1 // pred_region
      %s22 = ssub.s32 128, 128
      %23 = vsyncadd [#allocation7], %s22
      %s25 = sshll.u32 [#allocation6], 4
      %s26 = int_to_ptr.vmem [resolvable:$true] %s25
      %28 = dma.hbm_to_vmem [thread:$0]  %s1, 128, %s26, [#allocation7]
    $region9: #{tpu_custom_call.1} parent=1 // pred_fallthru
      _
    // Predicated region
    $region10: #{tpu_custom_call.1} parent=1 // pred_check
      _
    $region11: #{tpu_custom_call.1} parent=1 // pred_check_branch
      %30 = sbr.rel (0) target = $region13
    $region12: #{tpu_custom_call.1} parent=1 // pred_region
      %31 = dma.done [#allocation5], 128
    $region13: #{tpu_custom_call.1} parent=1 // pred_fallthru
      _
    // Predicated region
    $region14: #{tpu_custom_call.1} parent=1 // pred_check
      _
    $region15: #{tpu_custom_call.1} parent=1 // pred_check_branch
      %33 = sbr.rel (0) target = $region17
    $region16: #{tpu_custom_call.1} parent=1 // pred_region
      %34 = dma.done [#allocation7], 128
    $region17: #{tpu_custom_call.1} parent=1 // pred_fallthru
      _
    %p35 = scmp.eq.s32.totalorder 0, 0
    // Predicated region
    $region18: #{tpu_custom_call.1} parent=1 // pred_check
      %p36 = pneg %p35
    $region19: #{tpu_custom_call.1} parent=1 // pred_check_branch
      %38 = sbr.rel (%p36) target = $region21
    $region20: #{tpu_custom_call.1} parent=1 // pred_region
      %vm39 = vcmask 7168
      %40 = vst.msk [vmem:[#allocation2] sm:$0xff] %vm39, 0.0
      %41 = vst.msk [vmem:[#allocation3] sm:$0xff] %vm39, 0.0
    $region21: #{tpu_custom_call.1} parent=1 // pred_fallthru
      _
    %v42 = vld [vmem:[#allocation4] sm:$0xff]
    %v43 = vxor.u32 %v42, 2147483648
    %v44 = vmul.f32 %v43, 1.442695
    %v45 = vpow.pop %v44
    %v46 = vadd.f32 %v45, 1.0
    %v47 = vrcp.pop %v46
    %v48 = vmul.f32 1.0, %v47
    %v49 = vld [vmem:[#allocation6] sm:$0xff]
    %v50 = vld [vmem:[#allocation2] sm:$0xff]
    %v51 = vmul.f32 %v48, %v49
    %52 = vadd.xlane.f32.xlu0 %v51
    %v53 = vpop.xlane.xlu0 %52
    %v54 = vadd.f32 %v50, %v53
    %vm55 = vcmask 7168
    %56 = vst.msk [vmem:[#allocation2] sm:$0xff] %vm55, %v54
    %v57 = vld [vmem:[#allocation3] sm:$0xff]
    %v58 = vadd.f32 %v48, %v49
    %59 = vadd.xlane.f32.xlu0 %v58
    %v60 = vpop.xlane.xlu0 %59
    %v61 = vadd.f32 %v57, %v60
    %62 = vst.msk [vmem:[#allocation3] sm:$0xff] %vm55, %v61
    // Predicated region
    $region22: #{tpu_custom_call.1} parent=1 // pred_check
      %p63 = pneg %p35
    $region23: #{tpu_custom_call.1} parent=1 // pred_check_branch
      %65 = sbr.rel (%p63) target = $region25
    $region24: #{tpu_custom_call.1} parent=1 // pred_region
      %v66 = vld [vmem:[#allocation2] sm:$0xff]
      %v67 = vadd.f32 %v66, 1e-08
      %v68 = vld [vmem:[#allocation3] sm:$0xff]
      %v69 = vsub.f32 %v68, %v66
      %v70 = vadd.f32 %v69, 1e-08
      %v71 = vrcp.pop %v70
      %v72 = vmul.f32 %v67, %v71
      %v73 = vsub.f32 1.0, %v72
      %74 = vst.msk [vmem:[%s2] sm:$0xff] %vm55, %v73
    $region25: #{tpu_custom_call.1} parent=1 // pred_fallthru
      _
    // Predicated region
    $region26: #{tpu_custom_call.1} parent=1 // pred_check
      _
    $region27: #{tpu_custom_call.1} parent=1 // pred_check_branch
      %76 = sbr.rel (0) target = $region29
    $region28: #{tpu_custom_call.1} parent=1 // pred_region
      _
    $region29: #{tpu_custom_call.1} parent=1 // pred_fallthru
      _
    // Predicated region
    $region30: #{tpu_custom_call.1} parent=1 // pred_check
      _
    $region31: #{tpu_custom_call.1} parent=1 // pred_check_branch
      %78 = sbr.rel (0) target = $region33
    $region32: #{tpu_custom_call.1} parent=1 // pred_region
      _
    $region33: #{tpu_custom_call.1} parent=1 // pred_fallthru
      _
    %79 = vsyncpa [#allocation5], 1
    %80 = vsyncpa [#allocation7], 1

</llo_original>
